<compile_context>
chip_gen: v6e
topology: v6e:2x2x1
jax: 0.10.0
libtpu: 0.0.40
codegen_flags: <defaults>
</compile_context>

<pallas_src>
import jax
import jax.numpy as jnp
from jax.experimental import pallas as pl
from jax.experimental.pallas import tpu as pltpu

KH = KW = 3   # kernel size
STRIDE = 1
PAD = 0


def conv2d_kernel(p_ref, w_ref, o_ref):
    """Whole conv (all batches) as ONE lane-dense MXU matmul.

    p_ref: (K+1, NMpad) im2col patches; last K-row is all-ones (bias term),
           lanes padded with zeros to a multiple of 128.
    w_ref: (Cout, K+1)  weights with the bias folded in as the last column.
    o_ref: (Cout, NMpad) output; lane layout is (n, oh, ow) flattened.
    """
    o_ref[...] = jnp.dot(
        w_ref[...], p_ref[...], preferred_element_type=jnp.float32
    ).astype(o_ref.dtype)


@jax.jit
def conv2d_pallas(x_nchw, w_oihw, bias):
    """x_nchw: (N, Cin, H, W) f32; w_oihw: (Cout, Cin, KH, KW); bias: (Cout,)."""
    n, cin, h, w = x_nchw.shape
    cout = w_oihw.shape[0]
    oh = (h + 2 * PAD - KH) // STRIDE + 1
    ow = (w + 2 * PAD - KW) // STRIDE + 1
    m = oh * ow
    nm = n * m
    nmpad = nm + ((-nm) % 128)            # lane-dense: pad 392 -> 512

    # ---- im2col, single fused wrapper op chain (consumes NCHW directly) ----
    # patches[(kh*KW+kw)*Cin + ci, n*M + oh_*OW + ow_] = x[n, ci, oh_+kh, ow_+kw]
    taps = jnp.stack(
        [x_nchw[:, :, kh:kh + oh, kw:kw + ow]
         for kh in range(KH) for kw in range(KW)],
        axis=0,
    )                                                    # (KH*KW, N, Cin, OH, OW)
    taps = jnp.transpose(taps, (0, 2, 1, 3, 4))          # (KH*KW, Cin, N, OH, OW)
    patches = taps.reshape(KH * KW * cin, nm)            # (K, N*M)
    patches = jnp.concatenate(
        [patches, jnp.ones((1, nm), dtype=x_nchw.dtype)], axis=0)   # ones row -> bias
    patches = jnp.pad(patches, ((0, 0), (0, nmpad - nm)))           # (K+1, NMpad)

    # ---- one-time parameter prep: fold bias into the weight matrix ----
    # Weight K ordering (kh, kw, ci) matches the patch construction above.
    w2 = jnp.transpose(w_oihw, (0, 2, 3, 1)).reshape(cout, KH * KW * cin)
    w_aug = jnp.concatenate([w2, bias[:, None]], axis=1)            # (Cout, K+1)

    out_flat = pl.pallas_call(
        conv2d_kernel,
        out_shape=jax.ShapeDtypeStruct((cout, nmpad), x_nchw.dtype),
        in_specs=[
            pl.BlockSpec(memory_space=pltpu.MemorySpace.VMEM),
            pl.BlockSpec(memory_space=pltpu.MemorySpace.VMEM),
        ],
        out_specs=pl.BlockSpec(memory_space=pltpu.MemorySpace.VMEM),
    )(patches, w_aug)

    # Drop lane padding, unfold (Cout, N*M) -> NCHW.
    out = out_flat[:, :nm].reshape(cout, n, oh, ow)
    return jnp.transpose(out, (1, 0, 2, 3))


def conv2d_ref(x_nchw, w_oihw, bias):
    # Pure-JAX reference (matches torch.nn.Conv2d with stride=1, padding=0).
    out = jax.lax.conv_general_dilated(
        x_nchw, w_oihw, window_strides=(1, 1), padding="VALID",
        dimension_numbers=("NCHW", "OIHW", "NCHW"),
    )
    return out + bias.reshape(1, -1, 1, 1)


if __name__ == "__main__":
    key = jax.random.PRNGKey(0)
    kx, kw, kb = jax.random.split(key, 3)

    N, CIN, H, W = 2, 3, 16, 16
    COUT = 6

    x = jax.random.normal(kx, (N, CIN, H, W), dtype=jnp.float32)
    # Deterministic parameter init (Conv2d(3, 6, 3) shapes): weight (6,3,3,3), bias (6,)
    fan_in = CIN * KH * KW
    bound = 1.0 / (fan_in ** 0.5)
    weight = jax.random.uniform(kw, (COUT, CIN, KH, KW), dtype=jnp.float32,
                                minval=-bound, maxval=bound)
    bias = jax.random.uniform(kb, (COUT,), dtype=jnp.float32,
                              minval=-bound, maxval=bound)

    out = conv2d_pallas(x, weight, bias)
    out = jax.block_until_ready(out)

    ref = conv2d_ref(x, weight, bias)
    assert out.shape == (N, COUT, H - 2, W - 2), out.shape
    assert jnp.allclose(out, ref, atol=1e-5, rtol=1e-5), "mismatch vs reference"

    print("KERNEL_OK")
</pallas_src>

<mosaic_0001>
module attributes {stable_mosaic.version = 11 : i64} {
  func.func @conv2d_kernel(%arg0: memref<28x512xf32, #tpu.memory_space<vmem>>, %arg1: memref<6x28xf32, #tpu.memory_space<vmem>>, %arg2: memref<6x512xf32, #tpu.memory_space<vmem>>) attributes {dimension_semantics = [], scalar_prefetch = 0 : i64, scratch_operands = 0 : i64, tpu.core_type = #tpu.core_type<tc>} {
    %c0 = arith.constant 0 : index
    %c0_0 = arith.constant 0 : index
    %0 = vector.load %arg1[%c0, %c0_0] : memref<6x28xf32, #tpu.memory_space<vmem>>, vector<6x28xf32>
    %c0_1 = arith.constant 0 : index
    %c0_2 = arith.constant 0 : index
    %1 = vector.load %arg0[%c0_1, %c0_2] : memref<28x512xf32, #tpu.memory_space<vmem>>, vector<28x512xf32>
    %cst = arith.constant dense<0.000000e+00> : vector<6x512xf32>
    %2 = tpu.matmul %0, %1, %cst {dimension_numbers = #tpu.dot_dimension_numbers<[1], [0], [0], [1], [0, 0, 1, 1], [], []>} : vector<6x28xf32>, vector<28x512xf32>, vector<6x512xf32> -> vector<6x512xf32>
    %c0_3 = arith.constant 0 : index
    %c0_4 = arith.constant 0 : index
    %3 = vector.load %arg2[%c0_3, %c0_4] : memref<6x512xf32, #tpu.memory_space<vmem>>, vector<6x512xf32>
    tpu.vector_store %arg2[%c0_3, %c0_4], %2 {strides = array<i32>} : memref<6x512xf32, #tpu.memory_space<vmem>>, vector<6x512xf32>,
    return
  }
}

</mosaic_0001>

<llo_original>
// kernel: conv2d_pallas.1
$region0: #{conv2d_pallas.1}
  #allocation0 [shape = 'u32[]', space=smem, size = 0x4, offset = 0x4, fixed_abs, tag = 'smem constant byte address 0x4 - core index']
  #allocation1 [shape = 'u32[144,128]{1,0:T(1,128)}', space=vmem, size = 0x12000, scoped, tag = 'internal scratch']
  %s0 = inlined_call_operand.vmem [shape: f32[28,512], index: 0, kind: input, shape index: {}]
  %s1 = inlined_call_operand.vmem [shape: f32[6,28], index: 1, kind: input, shape index: {}]
  %s2 = inlined_call_operand.vmem [shape: f32[6,512], index: 2, kind: output, shape index: {}]
  %s3 = sld [smem:[#allocation0]]
  $region18: #{conv2d_pallas.1} parent=0
    _
  %s5 = ssub.s32 1, %s3
  %s6 = scalar_select 0, %s5, %s3
  // Predicated region
  $region2: #{conv2d_pallas.1} parent=0 // pred_check
    _
  $region3: #{conv2d_pallas.1} parent=0 // pred_check_branch
    %8 = sbr.rel (0) target = $region5
  $region4: #{conv2d_pallas.1} parent=0 // pred_region
    _
  $region5: #{conv2d_pallas.1} parent=0 // pred_fallthru
    _
  // Predicated region
  $region6: #{conv2d_pallas.1} parent=0 // pred_check
    _
  $region7: #{conv2d_pallas.1} parent=0 // pred_check_branch
    %10 = sbr.rel (0) target = $region9
  $region8: #{conv2d_pallas.1} parent=0 // pred_region
    _
  $region9: #{conv2d_pallas.1} parent=0 // pred_fallthru
    _
  %v11 = vld [vmem:[%s1] sm:$0x3f]
  %v12 = vld [vmem:[%s0] sm:$0xff]
  %v13 = vld [vmem:[%s0 + $0x8] sm:$0xff]
  %v14 = vld [vmem:[%s0 + $0x10] sm:$0xff]
  %v15 = vld [vmem:[%s0 + $0x18] sm:$0xff]
  %v16 = vld [vmem:[%s0 + $0x20] sm:$0xff]
  %v17 = vld [vmem:[%s0 + $0x28] sm:$0xff]
  %v18 = vld [vmem:[%s0 + $0x30] sm:$0xff]
  %v19 = vld [vmem:[%s0 + $0x38] sm:$0xff]
  %v20 = vld [vmem:[%s0 + $0x40] sm:$0xff]
  %v21 = vld [vmem:[%s0 + $0x48] sm:$0xff]
  %v22 = vld [vmem:[%s0 + $0x50] sm:$0xff]
  %v23 = vld [vmem:[%s0 + $0x58] sm:$0xff]
  %v24 = vld [vmem:[%s0 + $0x60] sm:$0xf]
  %v25 = vld [vmem:[%s0 + $0x68] sm:$0xf]
  %v26 = vld [vmem:[%s0 + $0x70] sm:$0xf]
  %v27 = vld [vmem:[%s0 + $0x78] sm:$0xf]
  %vm28 = vcmask 228352
  %v30 = vsel %vm28, %v11, 0
  %vm32 = vcmask 1043456
  %v34 = vsel %vm32, %v24, 0
  %v37 = vsel %vm32, %v25, 0
  %v40 = vsel %vm32, %v26, 0
  %v43 = vsel %vm32, %v27, 0
  %45 = vmatprep.subr.mxu0 0.0
  %46 = vmatpush1.msra.mxu0 0.0
  %47 = vmatprep.subr.mxu0 0.0
  %48 = vmatpush1.msra.mxu0 0.0
  %49 = vmatprep.subr.mxu0 0.0
  %50 = vmatpush1.msra.mxu0 0.0
  %51 = vmatprep.subr.mxu0 0.0
  %52 = vmatpush1.msra.mxu0 0.0
  %53 = vmatprep.subr.mxu0 0.0
  %54 = vmatpush1.msra.mxu0 0.0
  %55 = vmatprep.subr.mxu0 0.0
  %56 = vmatpush1.msra.mxu0 0.0
  %57 = vmatprep.subr.mxu0 0.0
  %58 = vmatpush1.msra.mxu0 0.0
  %59 = vmatprep.subr.mxu0 0.0
  %60 = vmatpush1.msra.mxu0 0.0
  %61 = vmatprep.subr.mxu0 0.0
  %62 = vmatpush1.msra.mxu0 0.0
  %63 = vmatprep.subr.mxu0 0.0
  %64 = vmatpush1.msra.mxu0 0.0
  %65 = vmatprep.subr.mxu0 0.0
  %66 = vmatpush1.msra.mxu0 0.0
  %67 = vmatprep.subr.mxu0 0.0
  %68 = vmatpush1.msra.mxu0 0.0
  %69 = vmatprep.subr.mxu0 %v37
  %70 = vmatpush1.msra.mxu0 %v34
  %71 = vmatprep.subr.mxu0 %v21
  %72 = vmatpush1.msra.mxu0 %v20
  %73 = vmatprep.subr.mxu0 %v17
  %74 = vmatpush1.msra.mxu0 %v16
  %75 = vmatprep.subr.mxu0 %v13
  %76 = vmatpush1.msra.mxu0 %v12
  %77 = vmatprep.subr.mxu0 0.0
  %78 = vmatpush2.msra.mxu0 0.0
  %79 = vmatprep.subr.mxu0 0.0
  %80 = vmatpush2.msra.mxu0 0.0
  %81 = vmatprep.subr.mxu0 0.0
  %82 = vmatpush2.msra.mxu0 0.0
  %83 = vmatprep.subr.mxu0 0.0
  %84 = vmatpush2.msra.mxu0 0.0
  %85 = vmatprep.subr.mxu0 0.0
  %86 = vmatpush2.msra.mxu0 0.0
  %87 = vmatprep.subr.mxu0 0.0
  %88 = vmatpush2.msra.mxu0 0.0
  %89 = vmatprep.subr.mxu0 0.0
  %90 = vmatpush2.msra.mxu0 0.0
  %91 = vmatprep.subr.mxu0 0.0
  %92 = vmatpush2.msra.mxu0 0.0
  %93 = vmatprep.subr.mxu0 0.0
  %94 = vmatpush2.msra.mxu0 0.0
  %95 = vmatprep.subr.mxu0 0.0
  %96 = vmatpush2.msra.mxu0 0.0
  %97 = vmatprep.subr.mxu0 0.0
  %98 = vmatpush2.msra.mxu0 0.0
  %99 = vmatprep.subr.mxu0 0.0
  %100 = vmatpush2.msra.mxu0 0.0
  %101 = vmatprep.subr.mxu0 0.0
  %102 = vmatpush2.msra.mxu0 0.0
  %103 = vmatprep.subr.mxu0 0.0
  %104 = vmatpush2.msra.mxu0 0.0
  %105 = vmatprep.subr.mxu0 0.0
  %106 = vmatpush2.msra.mxu0 0.0
  %107 = vmatprep.subr.mxu0 0.0
  %108 = vmatpush2.msra.mxu0 0.0
  %109 = vmatprep.mubr.f32.mxu0 0.0
  %110 = vmatmul.mubr.f32.gmra.mxu0 %v30
  %v111 = vpop.f32.mrf.mxu0
  %v112 = vadd.f32 0.0, %v111
  %v113 = vpop.f32.mrf.mxu0
  %v114 = vadd.f32 0.0, %v113
  %115 = vdwg.mxu0
  %116 = vmatprep.subr.mxu0 0.0
  %117 = vmatpush1.msra.mxu0 0.0
  %118 = vmatprep.subr.mxu0 0.0
  %119 = vmatpush1.msra.mxu0 0.0
  %120 = vmatprep.subr.mxu0 0.0
  %121 = vmatpush1.msra.mxu0 0.0
  %122 = vmatprep.subr.mxu0 0.0
  %123 = vmatpush1.msra.mxu0 0.0
  %124 = vmatprep.subr.mxu0 0.0
  %125 = vmatpush1.msra.mxu0 0.0
  %126 = vmatprep.subr.mxu0 0.0
  %127 = vmatpush1.msra.mxu0 0.0
  %128 = vmatprep.subr.mxu0 0.0
  %129 = vmatpush1.msra.mxu0 0.0
  %130 = vmatprep.subr.mxu0 0.0
  %131 = vmatpush1.msra.mxu0 0.0
  %132 = vmatprep.subr.mxu0 0.0
  %133 = vmatpush1.msra.mxu0 0.0
  %134 = vmatprep.subr.mxu0 0.0
  %135 = vmatpush1.msra.mxu0 0.0
  %136 = vmatprep.subr.mxu0 0.0
  %137 = vmatpush1.msra.mxu0 0.0
  %138 = vmatprep.subr.mxu0 0.0
  %139 = vmatpush1.msra.mxu0 0.0
  %140 = vmatprep.subr.mxu0 %v43
  %141 = vmatpush1.msra.mxu0 %v40
  %142 = vmatprep.subr.mxu0 %v23
  %143 = vmatpush1.msra.mxu0 %v22
  %144 = vmatprep.subr.mxu0 %v19
  %145 = vmatpush1.msra.mxu0 %v18
  %146 = vmatprep.subr.mxu0 %v15
  %147 = vmatpush1.msra.mxu0 %v14
  %148 = vmatprep.subr.mxu0 0.0
  %149 = vmatpush2.msra.mxu0 0.0
  %150 = vmatprep.subr.mxu0 0.0
  %151 = vmatpush2.msra.mxu0 0.0
  %152 = vmatprep.subr.mxu0 0.0
  %153 = vmatpush2.msra.mxu0 0.0
  %154 = vmatprep.subr.mxu0 0.0
  %155 = vmatpush2.msra.mxu0 0.0
  %156 = vmatprep.subr.mxu0 0.0
  %157 = vmatpush2.msra.mxu0 0.0
  %158 = vmatprep.subr.mxu0 0.0
  %159 = vmatpush2.msra.mxu0 0.0
  %160 = vmatprep.subr.mxu0 0.0
  %161 = vmatpush2.msra.mxu0 0.0
  %162 = vmatprep.subr.mxu0 0.0
  %163 = vmatpush2.msra.mxu0 0.0
  %164 = vmatprep.subr.mxu0 0.0
  %165 = vmatpush2.msra.mxu0 0.0
  %166 = vmatprep.subr.mxu0 0.0
  %167 = vmatpush2.msra.mxu0 0.0
  %168 = vmatprep.subr.mxu0 0.0
  %169 = vmatpush2.msra.mxu0 0.0
  %170 = vmatprep.subr.mxu0 0.0
  %171 = vmatpush2.msra.mxu0 0.0
  %172 = vmatprep.subr.mxu0 0.0
  %173 = vmatpush2.msra.mxu0 0.0
  %174 = vmatprep.subr.mxu0 0.0
  %175 = vmatpush2.msra.mxu0 0.0
  %176 = vmatprep.subr.mxu0 0.0
  %177 = vmatpush2.msra.mxu0 0.0
  %178 = vmatprep.subr.mxu0 0.0
  %179 = vmatpush2.msra.mxu0 0.0
  %180 = vmatprep.mubr.f32.mxu0 0.0
  %181 = vmatmul.mubr.f32.gmra.mxu0 %v30
  %v182 = vpop.f32.mrf.mxu0
  %v183 = vadd.f32 0.0, %v182
  %v184 = vpop.f32.mrf.mxu0
  %v185 = vadd.f32 0.0, %v184
  %186 = vdwg.mxu0
  %187 = vst [vmem:[%s2] sm:$0x3f] %v112
  %188 = vst [vmem:[%s2 + $0x8] sm:$0x3f] %v114
  %189 = vst [vmem:[%s2 + $0x10] sm:$0x3f] %v183
  %190 = vst [vmem:[%s2 + $0x18] sm:$0x3f] %v185
  // Predicated region
  $region10: #{conv2d_pallas.1} parent=0 // pred_check
    _
  $region11: #{conv2d_pallas.1} parent=0 // pred_check_branch
    %192 = sbr.rel (0) target = $region13
  $region12: #{conv2d_pallas.1} parent=0 // pred_region
    _
  $region13: #{conv2d_pallas.1} parent=0 // pred_fallthru
    _
  // Predicated region
  $region14: #{conv2d_pallas.1} parent=0 // pred_check
    _
  $region15: #{conv2d_pallas.1} parent=0 // pred_check_branch
    %194 = sbr.rel (0) target = $region17
  $region16: #{conv2d_pallas.1} parent=0 // pred_region
    _
  $region17: #{conv2d_pallas.1} parent=0 // pred_fallthru
    _

</llo_original>
